<compile_context>
chip_gen: v5e
topology: v5e:2x2
jax: 0.10.0
libtpu: 0.0.40
codegen_flags: <defaults>
</compile_context>

<pallas_src>
import functools

import jax
import jax.numpy as jnp
from jax.experimental import pallas as pl
from jax.experimental.pallas import tpu as pltpu


def _round_up(x, m):
    return (x + m - 1) // m * m


def _erf(x):
    # Abramowitz & Stegun 7.1.26, max abs error ~1.5e-7 (adequate for f32).
    a1, a2, a3, a4, a5 = (0.254829592, -0.284496736, 1.421413741,
                          -1.453152027, 1.061405429)
    p = 0.3275911
    ax = jnp.abs(x)
    t = 1.0 / (1.0 + p * ax)
    poly = ((((a5 * t + a4) * t + a3) * t + a2) * t + a1) * t
    y = 1.0 - poly * jnp.exp(-ax * ax)
    return jnp.where(x >= 0, y, -y)


def _gelu_exact(x):
    # nn.GELU() default (erf-based, not tanh approximation).
    return 0.5 * x * (1.0 + _erf(x * 0.7071067811865476))


# ----------------------------------------------------------------------------
# Kernels
# ----------------------------------------------------------------------------
def bn_stats_kernel(x_ref, gamma_ref, beta_ref, scale_ref, shift_ref,
                    sum_acc, sq_acc, *, inv_count, eps):
    """Accumulate per-channel stats of gelu(x); emit folded scale/shift."""
    n = pl.program_id(1)

    @pl.when(n == 0)
    def _():
        sum_acc[...] = jnp.zeros_like(sum_acc)
        sq_acc[...] = jnp.zeros_like(sq_acc)

    g = _gelu_exact(x_ref[0].astype(jnp.float32))            # (TC, Lp)
    sum_acc[...] += jnp.sum(g, axis=1, keepdims=True)        # (TC, 1)
    sq_acc[...] += jnp.sum(g * g, axis=1, keepdims=True)

    @pl.when(n == pl.num_programs(1) - 1)
    def _():
        mean = sum_acc[...] * inv_count
        var = jnp.maximum(sq_acc[...] * inv_count - mean * mean, 0.0)
        rstd = jax.lax.rsqrt(var + eps)
        sc = gamma_ref[...] * rstd
        scale_ref[...] = sc
        shift_ref[...] = beta_ref[...] - mean * sc


def gelu_affine_kernel(x_ref, scale_ref, shift_ref, o_ref):
    """y = gelu(x) * scale[c] + shift[c]  (fused GELU + BatchNorm affine)."""
    g = _gelu_exact(x_ref[0].astype(jnp.float32))            # (TC, Lp)
    o_ref[0] = (g * scale_ref[...] + shift_ref[...]).astype(o_ref.dtype)


# ----------------------------------------------------------------------------
# Wrapper
# ----------------------------------------------------------------------------
def activation_block_forward(x_nchw, gamma, beta, running_mean, running_var,
                             *, eps=1e-5, training=True):
    """Forward pass of activation_block: GELU -> BatchNorm2d (NCHW in/out)."""
    N, C, H, W = x_nchw.shape
    L = H * W

    # Lane-dense spatial axis (pad to a multiple of 128 only if needed; the
    # zero padding is stats-safe because gelu(0) == 0 and the mean divisor
    # uses the real element count).
    Lp = L if L % 128 == 0 else _round_up(L, 128)
    if C <= 256:
        TC, Cp = C, C                      # full-extent channel block (legal)
    else:
        TC = 256                           # multiple of 8 sublanes
        Cp = _round_up(C, TC)

    x3 = x_nchw.reshape(N, C, L)           # free reshape, no transpose
    if (Cp, Lp) != (C, L):
        x3 = jnp.pad(x3, ((0, 0), (0, Cp - C), (0, Lp - L)))

    def pad_c(v, fill):
        v = v.astype(jnp.float32)
        if Cp != C:
            v = jnp.pad(v, (0, Cp - C), constant_values=fill)
        return v.reshape(Cp, 1)

    num_cb = Cp // TC
    grid = (num_cb, N)

    x_spec = pl.BlockSpec((1, TC, Lp), lambda cb, n: (n, cb, 0))
    c_spec = pl.BlockSpec((TC, 1), lambda cb, n: (cb, 0))

    if training:
        gamma2 = pad_c(gamma, 0.0)
        beta2 = pad_c(beta, 0.0)
        scale2, shift2 = pl.pallas_call(
            functools.partial(bn_stats_kernel,
                              inv_count=1.0 / float(N * L), eps=float(eps)),
            out_shape=(jax.ShapeDtypeStruct((Cp, 1), jnp.float32),
                       jax.ShapeDtypeStruct((Cp, 1), jnp.float32)),
            grid_spec=pltpu.PrefetchScalarGridSpec(
                num_scalar_prefetch=0,
                grid=grid,
                in_specs=[x_spec, c_spec, c_spec],
                out_specs=[c_spec, c_spec],
                scratch_shapes=[pltpu.VMEM((TC, 1), jnp.float32),
                                pltpu.VMEM((TC, 1), jnp.float32)]),
            compiler_params=pltpu.CompilerParams(
                dimension_semantics=("parallel", "arbitrary")),
        )(x3, gamma2, beta2)
    else:
        # Eval mode: fold running stats into per-channel scale/shift (tiny).
        rstd = jax.lax.rsqrt(running_var.astype(jnp.float32) + eps)
        scale = gamma.astype(jnp.float32) * rstd
        shift = beta.astype(jnp.float32) - running_mean.astype(jnp.float32) * scale
        scale2 = pad_c(scale, 0.0)
        shift2 = pad_c(shift, 0.0)

    y3 = pl.pallas_call(
        gelu_affine_kernel,
        out_shape=jax.ShapeDtypeStruct((N, Cp, Lp), x_nchw.dtype),
        grid_spec=pltpu.PrefetchScalarGridSpec(
            num_scalar_prefetch=0,
            grid=grid,
            in_specs=[x_spec, c_spec, c_spec],
            out_specs=pl.BlockSpec((1, TC, Lp), lambda cb, n: (n, cb, 0)),
        ),
        compiler_params=pltpu.CompilerParams(
            dimension_semantics=("parallel", "parallel")),
    )(x3, scale2, shift2)

    if (Cp, Lp) != (C, L):
        y3 = y3[:, :C, :L]
    return y3.reshape(N, C, H, W)


# ----------------------------------------------------------------------------
# Self-test
# ----------------------------------------------------------------------------
if __name__ == "__main__":
    N, C, H, W = 2, 4, 16, 16
    eps = 1e-5

    key = jax.random.PRNGKey(0)
    kx, kg, kb, km, kv = jax.random.split(key, 5)
    x = jax.random.normal(kx, (N, C, H, W), dtype=jnp.float32)
    gamma = 1.0 + 0.1 * jax.random.normal(kg, (C,), dtype=jnp.float32)
    beta = 0.1 * jax.random.normal(kb, (C,), dtype=jnp.float32)
    running_mean = 0.1 * jax.random.normal(km, (C,), dtype=jnp.float32)
    running_var = 1.0 + 0.1 * jax.random.uniform(kv, (C,), dtype=jnp.float32)

    def reference(x, training):
        g = jax.nn.gelu(x, approximate=False)
        if training:
            mean = jnp.mean(g, axis=(0, 2, 3), keepdims=True)
            var = jnp.mean(jnp.square(g - mean), axis=(0, 2, 3), keepdims=True)
        else:
            mean = running_mean.reshape(1, C, 1, 1)
            var = running_var.reshape(1, C, 1, 1)
        return ((g - mean) * jax.lax.rsqrt(var + eps) * gamma.reshape(1, C, 1, 1)
                + beta.reshape(1, C, 1, 1))

    # training mode (nn.Module default): BatchNorm uses batch statistics
    out_train = activation_block_forward(
        x, gamma, beta, running_mean, running_var, eps=eps, training=True)
    out_train = jax.block_until_ready(out_train)
    assert out_train.shape == (N, C, H, W), out_train.shape
    assert jnp.allclose(out_train, reference(x, True), atol=1e-4, rtol=1e-4)

    # eval mode: BatchNorm uses running statistics (single fused kernel)
    out_eval = activation_block_forward(
        x, gamma, beta, running_mean, running_var, eps=eps, training=False)
    out_eval = jax.block_until_ready(out_eval)
    assert jnp.allclose(out_eval, reference(x, False), atol=1e-4, rtol=1e-4)

    print("KERNEL_OK")
</pallas_src>

<mosaic_0001>
module attributes {stable_mosaic.version = 11 : i64} {
  func.func @bn_stats_kernel(%arg0: i32, %arg1: i32, %arg2: memref<1x4x256xf32, #tpu.memory_space<vmem>>, %arg3: memref<4x1xf32, #tpu.memory_space<vmem>>, %arg4: memref<4x1xf32, #tpu.memory_space<vmem>>, %arg5: memref<4x1xf32, #tpu.memory_space<vmem>>, %arg6: memref<4x1xf32, #tpu.memory_space<vmem>>, %arg7: memref<4x1xf32, #tpu.memory_space<vmem>>, %arg8: memref<4x1xf32, #tpu.memory_space<vmem>>) attributes {dimension_semantics = [#tpu.dimension_semantics<parallel>, #tpu.dimension_semantics<arbitrary>], iteration_bounds = array<i64: 1, 2>, scalar_prefetch = 0 : i64, scratch_operands = 2 : i64, tpu.core_type = #tpu.core_type<tc>, window_params = [{transform_indices = @transform_0, window_bounds = array<i64: 1, 4, 256>}, {transform_indices = @transform_1, window_bounds = array<i64: 4, 1>}, {transform_indices = @transform_2, window_bounds = array<i64: 4, 1>}, {transform_indices = @transform_3, window_bounds = array<i64: 4, 1>}, {transform_indices = @transform_4, window_bounds = array<i64: 4, 1>}]} {
    %c0_i32 = arith.constant 0 : i32
    %0 = arith.cmpi eq, %arg1, %c0_i32 : i32
    %1 = arith.extui %0 : i1 to i32
    %c0_i32_0 = arith.constant 0 : i32
    %2 = arith.cmpi ne, %1, %c0_i32_0 : i32
    scf.if %2 {
      %cst_28 = arith.constant 0.000000e+00 : f32
      %59 = vector.broadcast %cst_28 : f32 to vector<4x1xf32>
      %c0_29 = arith.constant 0 : index
      %c0_30 = arith.constant 0 : index
      %60 = vector.load %arg7[%c0_29, %c0_30] : memref<4x1xf32, #tpu.memory_space<vmem>>, vector<4x1xf32>
      tpu.vector_store %arg7[%c0_29, %c0_30], %59 {strides = array<i32>} : memref<4x1xf32, #tpu.memory_space<vmem>>, vector<4x1xf32>,
      %cst_31 = arith.constant 0.000000e+00 : f32
      %61 = vector.broadcast %cst_31 : f32 to vector<4x1xf32>
      %c0_32 = arith.constant 0 : index
      %c0_33 = arith.constant 0 : index
      %62 = vector.load %arg8[%c0_32, %c0_33] : memref<4x1xf32, #tpu.memory_space<vmem>>, vector<4x1xf32>
      tpu.vector_store %arg8[%c0_32, %c0_33], %61 {strides = array<i32>} : memref<4x1xf32, #tpu.memory_space<vmem>>, vector<4x1xf32>,
    } else {
    }
    %c0 = arith.constant 0 : index
    %c0_1 = arith.constant 0 : index
    %c0_2 = arith.constant 0 : index
    %3 = vector.load %arg2[%c0, %c0_1, %c0_2] : memref<1x4x256xf32, #tpu.memory_space<vmem>>, vector<1x4x256xf32>
    %4 = vector.shape_cast %3 : vector<1x4x256xf32> to vector<4x256xf32>
    %cst = arith.constant 5.000000e-01 : f32
    %5 = vector.broadcast %cst : f32 to vector<4x256xf32>
    %6 = arith.mulf %5, %4 : vector<4x256xf32>
    %cst_3 = arith.constant 0.707106769 : f32
    %7 = vector.broadcast %cst_3 : f32 to vector<4x256xf32>
    %8 = arith.mulf %4, %7 : vector<4x256xf32>
    %9 = math.absf %8 : vector<4x256xf32>
    %cst_4 = arith.constant 0.327591091 : f32
    %10 = vector.broadcast %cst_4 : f32 to vector<4x256xf32>
    %11 = arith.mulf %10, %9 : vector<4x256xf32>
    %cst_5 = arith.constant 1.000000e+00 : f32
    %12 = vector.broadcast %cst_5 : f32 to vector<4x256xf32>
    %13 = arith.addf %12, %11 : vector<4x256xf32>
    %cst_6 = arith.constant 1.000000e+00 : f32
    %14 = vector.broadcast %cst_6 : f32 to vector<4x256xf32>
    %15 = arith.divf %14, %13 : vector<4x256xf32>
    %cst_7 = arith.constant 1.06140542 : f32
    %16 = vector.broadcast %cst_7 : f32 to vector<4x256xf32>
    %17 = arith.mulf %16, %15 : vector<4x256xf32>
    %cst_8 = arith.constant -1.45315206 : f32
    %18 = vector.broadcast %cst_8 : f32 to vector<4x256xf32>
    %19 = arith.addf %17, %18 : vector<4x256xf32>
    %20 = arith.mulf %19, %15 : vector<4x256xf32>
    %cst_9 = arith.constant 1.42141378 : f32
    %21 = vector.broadcast %cst_9 : f32 to vector<4x256xf32>
    %22 = arith.addf %20, %21 : vector<4x256xf32>
    %23 = arith.mulf %22, %15 : vector<4x256xf32>
    %cst_10 = arith.constant -0.284496725 : f32
    %24 = vector.broadcast %cst_10 : f32 to vector<4x256xf32>
    %25 = arith.addf %23, %24 : vector<4x256xf32>
    %26 = arith.mulf %25, %15 : vector<4x256xf32>
    %cst_11 = arith.constant 0.254829586 : f32
    %27 = vector.broadcast %cst_11 : f32 to vector<4x256xf32>
    %28 = arith.addf %26, %27 : vector<4x256xf32>
    %29 = arith.mulf %28, %15 : vector<4x256xf32>
    %cst_12 = arith.constant 0.000000e+00 : f32
    %30 = vector.broadcast %cst_12 : f32 to vector<4x256xf32>
    %31 = arith.subf %30, %9 : vector<4x256xf32>
    %32 = arith.mulf %31, %9 : vector<4x256xf32>
    %33 = math.exp %32 : vector<4x256xf32>
    %34 = arith.mulf %29, %33 : vector<4x256xf32>
    %cst_13 = arith.constant 1.000000e+00 : f32
    %35 = vector.broadcast %cst_13 : f32 to vector<4x256xf32>
    %36 = arith.subf %35, %34 : vector<4x256xf32>
    %cst_14 = arith.constant 0.000000e+00 : f32
    %37 = vector.broadcast %cst_14 : f32 to vector<4x256xf32>
    %38 = arith.cmpf oge, %8, %37 : vector<4x256xf32>
    %cst_15 = arith.constant 0.000000e+00 : f32
    %39 = vector.broadcast %cst_15 : f32 to vector<4x256xf32>
    %40 = arith.subf %39, %36 : vector<4x256xf32>
    %41 = arith.select %38, %36, %40 : vector<4x256xi1>, vector<4x256xf32>
    %cst_16 = arith.constant 1.000000e+00 : f32
    %42 = vector.broadcast %cst_16 : f32 to vector<4x256xf32>
    %43 = arith.addf %42, %41 : vector<4x256xf32>
    %44 = arith.mulf %6, %43 : vector<4x256xf32>
    %c0_17 = arith.constant 0 : index
    %c0_18 = arith.constant 0 : index
    %45 = vector.load %arg7[%c0_17, %c0_18] : memref<4x1xf32, #tpu.memory_space<vmem>>, vector<4x1xf32>
    %cst_19 = arith.constant dense<0.000000e+00> : vector<4xf32>
    %46 = vector.multi_reduction <add>, %44, %cst_19 [1] : vector<4x256xf32> to vector<4xf32>
    %47 = vector.shape_cast %46 : vector<4xf32> to vector<4x1xf32>
    %48 = arith.addf %45, %47 : vector<4x1xf32>
    %c0_20 = arith.constant 0 : index
    %c0_21 = arith.constant 0 : index
    %49 = vector.load %arg7[%c0_20, %c0_21] : memref<4x1xf32, #tpu.memory_space<vmem>>, vector<4x1xf32>
    tpu.vector_store %arg7[%c0_20, %c0_21], %48 {strides = array<i32>} : memref<4x1xf32, #tpu.memory_space<vmem>>, vector<4x1xf32>,
    %c0_22 = arith.constant 0 : index
    %c0_23 = arith.constant 0 : index
    %50 = vector.load %arg8[%c0_22, %c0_23] : memref<4x1xf32, #tpu.memory_space<vmem>>, vector<4x1xf32>
    %51 = arith.mulf %44, %44 : vector<4x256xf32>
    %cst_24 = arith.constant dense<0.000000e+00> : vector<4xf32>
    %52 = vector.multi_reduction <add>, %51, %cst_24 [1] : vector<4x256xf32> to vector<4xf32>
    %53 = vector.shape_cast %52 : vector<4xf32> to vector<4x1xf32>
    %54 = arith.addf %50, %53 : vector<4x1xf32>
    %c0_25 = arith.constant 0 : index
    %c0_26 = arith.constant 0 : index
    %55 = vector.load %arg8[%c0_25, %c0_26] : memref<4x1xf32, #tpu.memory_space<vmem>>, vector<4x1xf32>
    tpu.vector_store %arg8[%c0_25, %c0_26], %54 {strides = array<i32>} : memref<4x1xf32, #tpu.memory_space<vmem>>, vector<4x1xf32>,
    %c1_i32 = arith.constant 1 : i32
    %56 = arith.cmpi eq, %arg1, %c1_i32 : i32
    %57 = arith.extui %56 : i1 to i32
    %c0_i32_27 = arith.constant 0 : i32
    %58 = arith.cmpi ne, %57, %c0_i32_27 : i32
    scf.if %58 {
      %c0_28 = arith.constant 0 : index
      %c0_29 = arith.constant 0 : index
      %59 = vector.load %arg7[%c0_28, %c0_29] : memref<4x1xf32, #tpu.memory_space<vmem>>, vector<4x1xf32>
      %cst_30 = arith.constant 0.001953125 : f32
      %60 = vector.broadcast %cst_30 : f32 to vector<4x1xf32>
      %61 = arith.mulf %59, %60 : vector<4x1xf32>
      %c0_31 = arith.constant 0 : index
      %c0_32 = arith.constant 0 : index
      %62 = vector.load %arg8[%c0_31, %c0_32] : memref<4x1xf32, #tpu.memory_space<vmem>>, vector<4x1xf32>
      %cst_33 = arith.constant 0.001953125 : f32
      %63 = vector.broadcast %cst_33 : f32 to vector<4x1xf32>
      %64 = arith.mulf %62, %63 : vector<4x1xf32>
      %65 = arith.mulf %61, %61 : vector<4x1xf32>
      %66 = arith.subf %64, %65 : vector<4x1xf32>
      %cst_34 = arith.constant 0.000000e+00 : f32
      %67 = vector.broadcast %cst_34 : f32 to vector<4x1xf32>
      %68 = arith.maximumf %66, %67 : vector<4x1xf32>
      %cst_35 = arith.constant 9.99999974E-6 : f32
      %69 = vector.broadcast %cst_35 : f32 to vector<4x1xf32>
      %70 = arith.addf %68, %69 : vector<4x1xf32>
      %71 = math.rsqrt %70 : vector<4x1xf32>
      %c0_36 = arith.constant 0 : index
      %c0_37 = arith.constant 0 : index
      %72 = vector.load %arg3[%c0_36, %c0_37] : memref<4x1xf32, #tpu.memory_space<vmem>>, vector<4x1xf32>
      %73 = arith.mulf %72, %71 : vector<4x1xf32>
      %c0_38 = arith.constant 0 : index
      %c0_39 = arith.constant 0 : index
      %74 = vector.load %arg5[%c0_38, %c0_39] : memref<4x1xf32, #tpu.memory_space<vmem>>, vector<4x1xf32>
      tpu.vector_store %arg5[%c0_38, %c0_39], %73 {strides = array<i32>} : memref<4x1xf32, #tpu.memory_space<vmem>>, vector<4x1xf32>,
      %c0_40 = arith.constant 0 : index
      %c0_41 = arith.constant 0 : index
      %75 = vector.load %arg4[%c0_40, %c0_41] : memref<4x1xf32, #tpu.memory_space<vmem>>, vector<4x1xf32>
      %76 = arith.mulf %61, %73 : vector<4x1xf32>
      %77 = arith.subf %75, %76 : vector<4x1xf32>
      %c0_42 = arith.constant 0 : index
      %c0_43 = arith.constant 0 : index
      %78 = vector.load %arg6[%c0_42, %c0_43] : memref<4x1xf32, #tpu.memory_space<vmem>>, vector<4x1xf32>
      tpu.vector_store %arg6[%c0_42, %c0_43], %77 {strides = array<i32>} : memref<4x1xf32, #tpu.memory_space<vmem>>, vector<4x1xf32>,
    } else {
    }
    return
  }
  func.func @transform_0(%arg0: i32, %arg1: i32) -> (i32, i32, i32) {
    %c0_i32 = arith.constant 0 : i32
    %c0_i32_0 = arith.constant 0 : i32
    return %arg1, %arg0, %c0_i32 : i32, i32, i32
  }
  func.func @transform_1(%arg0: i32, %arg1: i32) -> (i32, i32) {
    %c0_i32 = arith.constant 0 : i32
    %c0_i32_0 = arith.constant 0 : i32
    return %arg0, %c0_i32 : i32, i32
  }
  func.func @transform_2(%arg0: i32, %arg1: i32) -> (i32, i32) {
    %c0_i32 = arith.constant 0 : i32
    %c0_i32_0 = arith.constant 0 : i32
    return %arg0, %c0_i32 : i32, i32
  }
  func.func @transform_3(%arg0: i32, %arg1: i32) -> (i32, i32) {
    %c0_i32 = arith.constant 0 : i32
    %c0_i32_0 = arith.constant 0 : i32
    return %arg0, %c0_i32 : i32, i32
  }
  func.func @transform_4(%arg0: i32, %arg1: i32) -> (i32, i32) {
    %c0_i32 = arith.constant 0 : i32
    %c0_i32_0 = arith.constant 0 : i32
    return %arg0, %c0_i32 : i32, i32
  }
}

</mosaic_0001>

<llo_original>
// kernel: tpu_custom_call.1
$region0: #{tpu_custom_call.1}
  #allocation0 [shape = 'u32[]', space=smem, size = 0x4, offset = 0x4, fixed_abs, tag = 'smem constant byte address 0x4 - core index']
  #allocation1 [shape = 'u32[72,128]{1,0:T(1,128)}', space=vmem, size = 0x9000, scoped, tag = 'internal scratch']
  #allocation2 [shape = 'f32[4,1]{1,0:T(4,128)}', space=vmem, size = 0x800, scoped, tag = 'scratch operand']
  #allocation3 [shape = 'f32[4,1]{1,0:T(4,128)}', space=vmem, size = 0x800, scoped, tag = 'scratch operand']
  %s0 = inlined_call_operand.hbm [shape: f32[2,4,256], index: 0, kind: input, shape index: {}]
  %s1 = inlined_call_operand.vmem [shape: f32[4,1], index: 1, kind: input, shape index: {}]
  %s2 = inlined_call_operand.vmem [shape: f32[4,1], index: 2, kind: input, shape index: {}]
  %s3 = inlined_call_operand.vmem [shape: f32[4,1], index: 3, kind: output, shape index: {0}]
  %s4 = inlined_call_operand.vmem [shape: f32[4,1], index: 4, kind: output, shape index: {1}]
  %5 = xla_tuple %s3, %s4
  %s6 = sld [smem:[#allocation0]]
  $region65: #{tpu_custom_call.1} parent=0
    _
  %s8 = ssub.s32 1, %s6
  %s9 = scalar_select 0, %s8, %s6
  $region1: #{tpu_custom_call.1} parent=0
    #allocation4 [shape = 'u8[8192]{0}', space=vmem, size = 0x2000, scoped, tag = 'input window, operand 0']
    #allocation5 [shape = 's32[2]{0}', space=sflag, size = 0x8, scoped, tag = 'scoped memory for tpu_custom_call.1']
    %10 = vsyncpa [#allocation5], 0
    %s11 = scalar_lea.sflag [#allocation5], 1
    %12 = vsyncpa %s11, 0
    loop: start=0, step=1, limit=4
    $region2: #{tpu_custom_call.1} parent=1 // loop_pre_header
      _
    $region3: #{tpu_custom_call.1} parent=1 // loop_header
      %s14 = sphi 0, %s18
      %p15 = scmp.ge.s32.totalorder %s14, 4
      %s21 = sphi 0, %s33
      %s22 = sphi 0, %s29
      %s23 = sphi 0, %s21
      %s24 = sphi 0, %s22
      %s25 = sphi 0, %s23
      %s26 = sphi 0, %s24
      %s38 = sphi 0, %s40
      %s41 = sphi 0, %s38
      %s42 = sphi 0, %s41
      %s58 = sphi 0, %s42
      %s64 = sphi 0, %s66
      %s67 = sphi 0, %s64
      %s68 = sphi 0, %s67
      %s84 = sphi 0, %s68
      %s90 = sphi 0, %s92
      %s93 = sphi 0, %s90
      %s94 = sphi 0, %s93
      %s110 = sphi 0, %s94
      %s116 = sphi 0, %s118
      %s119 = sphi 0, %s116
      %s120 = sphi 0, %s119
      %s136 = sphi 0, %s120
      %s142 = sphi 0, %s144
      %s145 = sphi 0, %s142
      %s146 = sphi 0, %s145
      %s162 = sphi 0, %s146
    $region4: #{tpu_custom_call.1} parent=1 // loop_header_branch
      %17 = sbr.rel (%p15) target = $region8
    $region5: #{tpu_custom_call.1} parent=1 // loop_body
      %s19 = ssub.s32 %s14, 1
      %s20 = ssub.s32 %s14, 2
      %s27 = sadd.s32 1, %s22
      %p28 = scmp.ge.s32.totalorder %s27, 2
      %s29 = scalar_select %p28, 0, %s27
      %s30 = sadd.s32 1, %s21
      %s31 = scalar_select %p28, %s30, %s21
      %p32 = scmp.ge.s32.totalorder %s31, 1
      %s33 = scalar_select %p32, 0, %s31
      %s34 = ssub.s32 %s22, %s29
      %s35 = ssub.s32 %s21, %s33
      %s36 = sor.u32 %s34, %s35
      %p37 = scmp.eq.s32.totalorder %s36, 0
      %s39 = sadd.s32 %s38, 1
      %s40 = scalar_select %p37, %s38, %s39
      %p43 = pneg %p37
      %p44 = scmp.eq.s32.totalorder %s14, 1
      %p45 = por %p43, %p44
      %p46 = scmp.ne.s32.totalorder %s38, %s41
      %p47 = scmp.eq.s32.totalorder %s14, 0
      %p48 = por %p46, %p47
      %p49 = scmp.ne.s32.totalorder %s38, %s41
      %p50 = scmp.eq.s32.totalorder %s19, 1
      %p51 = por %p49, %p50
      %p52 = scmp.ne.s32.totalorder %s41, %s42
      %p53 = scmp.eq.s32.totalorder %s19, 0
      %p54 = por %p52, %p53
      %p55 = scmp.ne.s32.totalorder %s41, %s42
      %p56 = scmp.eq.s32.totalorder %s20, 1
      %p57 = por %p55, %p56
      %p59 = scmp.ne.s32.totalorder %s42, %s58
      %p60 = scmp.eq.s32.totalorder %s20, 0
      %p61 = por %p59, %p60
      %s62 = ssub.s32 %s21, %s33
      %p63 = scmp.eq.s32.totalorder %s62, 0
      %s65 = sadd.s32 %s64, 1
      %s66 = scalar_select %p63, %s64, %s65
      %p69 = pneg %p63
      %p70 = scmp.eq.s32.totalorder %s14, 1
      %p71 = por %p69, %p70
      %p72 = scmp.ne.s32.totalorder %s64, %s67
      %p73 = scmp.eq.s32.totalorder %s14, 0
      %p74 = por %p72, %p73
      %p75 = scmp.ne.s32.totalorder %s64, %s67
      %p76 = scmp.eq.s32.totalorder %s19, 1
      %p77 = por %p75, %p76
      %p78 = scmp.ne.s32.totalorder %s67, %s68
      %p79 = scmp.eq.s32.totalorder %s19, 0
      %p80 = por %p78, %p79
      %p81 = scmp.ne.s32.totalorder %s67, %s68
      %p82 = scmp.eq.s32.totalorder %s20, 1
      %p83 = por %p81, %p82
      %p85 = scmp.ne.s32.totalorder %s68, %s84
      %p86 = scmp.eq.s32.totalorder %s20, 0
      %p87 = por %p85, %p86
      %s88 = ssub.s32 %s21, %s33
      %p89 = scmp.eq.s32.totalorder %s88, 0
      %s91 = sadd.s32 %s90, 1
      %s92 = scalar_select %p89, %s90, %s91
      %p95 = pneg %p89
      %p96 = scmp.eq.s32.totalorder %s14, 1
      %p97 = por %p95, %p96
      %p98 = scmp.ne.s32.totalorder %s90, %s93
      %p99 = scmp.eq.s32.totalorder %s14, 0
      %p100 = por %p98, %p99
      %p101 = scmp.ne.s32.totalorder %s90, %s93
      %p102 = scmp.eq.s32.totalorder %s19, 1
      %p103 = por %p101, %p102
      %p104 = scmp.ne.s32.totalorder %s93, %s94
      %p105 = scmp.eq.s32.totalorder %s19, 0
      %p106 = por %p104, %p105
      %p107 = scmp.ne.s32.totalorder %s93, %s94
      %p108 = scmp.eq.s32.totalorder %s20, 1
      %p109 = por %p107, %p108
      %p111 = scmp.ne.s32.totalorder %s94, %s110
      %p112 = scmp.eq.s32.totalorder %s20, 0
      %p113 = por %p111, %p112
      %s114 = ssub.s32 %s21, %s33
      %p115 = scmp.eq.s32.totalorder %s114, 0
      %s117 = sadd.s32 %s116, 1
      %s118 = scalar_select %p115, %s116, %s117
      %p121 = pneg %p115
      %p122 = scmp.eq.s32.totalorder %s14, 1
      %p123 = por %p121, %p122
      %p124 = scmp.ne.s32.totalorder %s116, %s119
      %p125 = scmp.eq.s32.totalorder %s14, 0
      %p126 = por %p124, %p125
      %p127 = scmp.ne.s32.totalorder %s116, %s119
      %p128 = scmp.eq.s32.totalorder %s19, 1
      %p129 = por %p127, %p128
      %p130 = scmp.ne.s32.totalorder %s119, %s120
      %p131 = scmp.eq.s32.totalorder %s19, 0
      %p132 = por %p130, %p131
      %p133 = scmp.ne.s32.totalorder %s119, %s120
      %p134 = scmp.eq.s32.totalorder %s20, 1
      %p135 = por %p133, %p134
      %p137 = scmp.ne.s32.totalorder %s120, %s136
      %p138 = scmp.eq.s32.totalorder %s20, 0
      %p139 = por %p137, %p138
      %s140 = ssub.s32 %s21, %s33
      %p141 = scmp.eq.s32.totalorder %s140, 0
      %s143 = sadd.s32 %s142, 1
      %s144 = scalar_select %p141, %s142, %s143
      %p147 = pneg %p141
      %p148 = scmp.eq.s32.totalorder %s14, 1
      %p149 = por %p147, %p148
      %p150 = scmp.ne.s32.totalorder %s142, %s145
      %p151 = scmp.eq.s32.totalorder %s14, 0
      %p152 = por %p150, %p151
      %p153 = scmp.ne.s32.totalorder %s142, %s145
      %p154 = scmp.eq.s32.totalorder %s19, 1
      %p155 = por %p153, %p154
      %p156 = scmp.ne.s32.totalorder %s145, %s146
      %p157 = scmp.eq.s32.totalorder %s19, 0
      %p158 = por %p156, %p157
      %p159 = scmp.ne.s32.totalorder %s145, %s146
      %p160 = scmp.eq.s32.totalorder %s20, 1
      %p161 = por %p159, %p160
      %p163 = scmp.ne.s32.totalorder %s146, %s162
      %p164 = scmp.eq.s32.totalorder %s20, 0
      %p165 = por %p163, %p164
      %p166 = scmp.le.s32.totalorder 1, %s14
      %p167 = scmp.lt.s32.totalorder %s14, 3
      %p168 = pnand %p166, %p167
      %p169 = pneg %p168
      // Predicated region
      $region9: #{tpu_custom_call.1} parent=5 // pred_check
        _
      $region10: #{tpu_custom_call.1} parent=5 // pred_check_branch
        %171 = sbr.rel (%p168) target = $region12
      $region11: #{tpu_custom_call.1} parent=5 // pred_region
        %s172 = ssub.s32 %s14, 1
        // Predicated region
        $region13: #{tpu_custom_call.1} parent=11 // pred_check
          %p173 = pneg %p80
        $region14: #{tpu_custom_call.1} parent=11 // pred_check_branch
          %175 = sbr.rel (%p173) target = $region16
        $region15: #{tpu_custom_call.1} parent=11 // pred_region
          %p176 = scmp.lt.s32.totalorder %s23, 0
          %s177 = scalar_select %p176, %s23, 0
          %s178 = smul.addr %s177, 4
          %s179 = scalar_lea.vmem %s1, %s178
        $region16: #{tpu_custom_call.1} parent=11 // pred_fallthru
          _
        // Predicated region
        $region17: #{tpu_custom_call.1} parent=11 // pred_check
          %p180 = pneg %p106
        $region18: #{tpu_custom_call.1} parent=11 // pred_check_branch
          %182 = sbr.rel (%p180) target = $region20
        $region19: #{tpu_custom_call.1} parent=11 // pred_region
          %p183 = scmp.lt.s32.totalorder %s23, 0
          %s184 = scalar_select %p183, %s23, 0
          %s185 = smul.addr %s184, 4
          %s186 = scalar_lea.vmem %s2, %s185
        $region20: #{tpu_custom_call.1} parent=11 // pred_fallthru
          _
      $region12: #{tpu_custom_call.1} parent=5 // pred_fallthru
        _
      %p187 = scmp.lt.s32.totalorder %s14, 2
      // Predicated region
      $region21: #{tpu_custom_call.1} parent=5 // pred_check
        %p188 = pneg %p187
      $region22: #{tpu_custom_call.1} parent=5 // pred_check_branch
        %190 = sbr.rel (%p188) target = $region24
      $region23: #{tpu_custom_call.1} parent=5 // pred_region
        // Predicated region
        $region25: #{tpu_custom_call.1} parent=23 // pred_check
          %p191 = pneg %p48
        $region26: #{tpu_custom_call.1} parent=23 // pred_check_branch
          %193 = sbr.rel (%p191) target = $region28
        $region27: #{tpu_custom_call.1} parent=23 // pred_region
          %s194 = sand.u32 %s38, 1
          %s195 = scalar_lea.sflag [#allocation5], %s194
          %s196 = sand.u32 %s38, 1
          %s197 = smul.addr %s196, 8
          %s198 = scalar_lea.vmem [#allocation4], %s197
          %200 = vsyncadd %s195, 0
          %s201 = smul.addr %s21, 2
          %s202 = smul.addr %s22, 2
          %s203 = sadd.s32 %s201, %s202
          %s204 = smul.addr %s203, 4
          %s205 = scalar_lea.hbm %s0, %s204
          %s207 = sshll.u32 %s205, 4
          %s208 = int_to_ptr.hbm [resolvable:$true] %s207
          %s209 = sshll.u32 %s198, 4
          %s210 = int_to_ptr.vmem [resolvable:$true] %s209
          %212 = dma.hbm_to_vmem [thread:$0]  %s208, 128, %s210, %s195
        $region28: #{tpu_custom_call.1} parent=23 // pred_fallthru
          _
      $region24: #{tpu_custom_call.1} parent=5 // pred_fallthru
        _
      %p213 = scmp.le.s32.totalorder 1, %s14
      %p214 = scmp.lt.s32.totalorder %s14, 3
      %p215 = pnand %p213, %p214
      %p216 = pneg %p215
      // Predicated region
      $region29: #{tpu_custom_call.1} parent=5 // pred_check
        _
      $region30: #{tpu_custom_call.1} parent=5 // pred_check_branch
        %218 = sbr.rel (%p215) target = $region32
      $region31: #{tpu_custom_call.1} parent=5 // pred_region
        %s219 = ssub.s32 %s14, 1
        %s220 = sand.u32 %s41, 1
        %s221 = scalar_lea.sflag [#allocation5], %s220
        %s222 = sand.u32 %s41, 1
        %s223 = smul.addr %s222, 8
        %s224 = scalar_lea.vmem [#allocation4], %s223
        // Predicated region
        $region33: #{tpu_custom_call.1} parent=31 // pred_check
          %p225 = pneg %p54
        $region34: #{tpu_custom_call.1} parent=31 // pred_check_branch
          %227 = sbr.rel (%p225) target = $region36
        $region35: #{tpu_custom_call.1} parent=31 // pred_region
          %229 = dma.done %s221, 128
        $region36: #{tpu_custom_call.1} parent=31 // pred_fallthru
          _
        %s230 = sand.u32 %s41, 1
        %s231 = scalar_lea.sflag [#allocation5], %s230
        %s232 = sand.u32 %s41, 1
        %s233 = smul.addr %s232, 8
        %s234 = scalar_lea.vmem [#allocation4], %s233
        %p235 = pneg %p54
        %p236 = pneg %p51
        %p237 = scmp.lt.s32.totalorder %s23, 0
        %s238 = scalar_select %p237, %s23, 0
        %s239 = smul.addr %s238, 4
        %s240 = scalar_lea.vmem %s1, %s239
        %p241 = pneg %p80
        %p242 = pneg %p77
        %p243 = scmp.lt.s32.totalorder %s23, 0
        %s244 = scalar_select %p243, %s23, 0
        %s245 = smul.addr %s244, 4
        %s246 = scalar_lea.vmem %s2, %s245
        %p247 = pneg %p106
        %p248 = pneg %p103
        %p249 = pneg %p132
        %p250 = pneg %p129
        %p251 = scmp.lt.s32.totalorder %s23, 0
        %s252 = scalar_select %p251, %s23, 0
        %s253 = smul.addr %s252, 4
        %s254 = scalar_lea.vmem %s3, %s253
        %p255 = pneg %p158
        %p256 = pneg %p155
        %p257 = scmp.lt.s32.totalorder %s23, 0
        %s258 = scalar_select %p257, %s23, 0
        %s259 = smul.addr %s258, 4
        %s260 = scalar_lea.vmem %s4, %s259
        %p261 = scmp.lt.s32.totalorder %s23, 0
        %s262 = scalar_select %p261, %s23, 0
        %s263 = smul.addr %s262, 4
        %s264 = scalar_lea.vmem %s1, %s263
        %p265 = scmp.lt.s32.totalorder %s23, 0
        %s266 = scalar_select %p265, %s23, 0
        %s267 = smul.addr %s266, 4
        %s268 = scalar_lea.vmem %s2, %s267
        %p269 = scmp.lt.s32.totalorder %s23, 0
        %s270 = scalar_select %p269, %s23, 0
        %s271 = smul.addr %s270, 4
        %s272 = scalar_lea.vmem %s3, %s271
        %p273 = scmp.lt.s32.totalorder %s23, 0
        %s274 = scalar_select %p273, %s23, 0
        %s275 = smul.addr %s274, 4
        %s276 = scalar_lea.vmem %s4, %s275
        %p277 = scmp.eq.s32.totalorder %s24, 0
        // Predicated region
        $region37: #{tpu_custom_call.1} parent=31 // pred_check
          %p278 = pneg %p277
        $region38: #{tpu_custom_call.1} parent=31 // pred_check_branch
          %280 = sbr.rel (%p278) target = $region40
        $region39: #{tpu_custom_call.1} parent=31 // pred_region
          %vm281 = vcmask 3072
          %282 = vst.msk [vmem:[#allocation2] sm:$0xf] %vm281, 0.0
          %283 = vst.msk [vmem:[#allocation3] sm:$0xf] %vm281, 0.0
        $region40: #{tpu_custom_call.1} parent=31 // pred_fallthru
          _
        %v284 = vld [vmem:[%s224] sm:$0xff]
        %v285 = vmul.f32 %v284, 0.5
        %v286 = vmul.f32 %v284, 0.70710677
        %v287 = vand.u32 2147483647, %v286
        %v288 = vmul.f32 %v287, 0.3275911
        %v289 = vadd.f32 %v288, 1.0
        %v290 = vrcp.pop %v289
        %v291 = vmul.f32 %v289, %v290
        %v292 = vsub.f32 1.0, %v291
        %v293 = vmul.f32 %v290, %v292
        %v294 = vadd.f32 %v290, %v293
        %vm295 = vweird.f32 %v289
        %vm296 = vweird.f32 %v290
        %vm297 = vmor %vm295, %vm296
        %v298 = vsel %vm297, %v290, %v294
        %v299 = vand.u32 2147483647, %v289
        %vm300 = vcmp.eq.f32.partialorder %v299, 8.507059e+37
        %v301 = vand.u32 %v289, 2147483648
        %v302 = vor.u32 1.1754944e-38, %v301
        %v303 = vsel %vm300, %v302, %v298
        %v304 = vmul.f32 1.0, %v303
        %v305 = vmul.f32 %v304, 1.0614054
        %v306 = vadd.f32 %v305, -1.4531521
        %v307 = vmul.f32 %v306, %v304
        %v308 = vadd.f32 %v307, 1.4214138
        %v309 = vmul.f32 %v308, %v304
        %v310 = vadd.f32 %v309, -0.28449672
        %v311 = vmul.f32 %v310, %v304
        %v312 = vadd.f32 %v311, 0.2548296
        %v313 = vmul.f32 %v312, %v304
        %v314 = vsub.f32 0.0, %v287
        %v315 = vmul.f32 %v314, %v287
        %v316 = vmul.f32 %v315, 1.442695
        %v317 = vpow.pop %v316
        %v318 = vmul.f32 %v313, %v317
        %v319 = vsub.f32 1.0, %v318
        %vm320 = vcmp.ge.f32.partialorder %v286, 0.0
        %v321 = vsub.f32 0.0, %v319
        %v322 = vsel %vm320, %v319, %v321
        %v323 = vadd.f32 %v322, 1.0
        %v324 = vmul.f32 %v285, %v323
        %v325 = vld [vmem:[#allocation2] sm:$0xf]
        %327 = vst [vmem:[#allocation1] ss:$2 sm:$0xff] %v324
        %v328 = vld.sshfl [vmem:[#allocation1] sm:$0xff pattern:$0x75316420]
        %v329 = vld.sshfl [vmem:[#allocation1 + $0x8] sm:$0xff pattern:$0x75316420]
        %vm332 = vcmask 1043456
        %v333 = vsel %vm332, %v328, 0.0
        %v334 = vsel %vm332, %v329, 0.0
        %v335 = vadd.f32 %v333, %v334
        %336 = vadd.xlane.f32.xlu0 %v335
        %v337 = vpop.xlane.xlu0 %336
        %v338 = vadd.f32 %v325, %v337
        %vm339 = vcmask 3072
        %340 = vst.msk [vmem:[#allocation2] sm:$0xf] %vm339, %v338
        %v341 = vld [vmem:[#allocation3] sm:$0xf]
        %v342 = vmul.f32 %v324, %v324
        %344 = vst [vmem:[#allocation1] ss:$2 sm:$0xff] %v342
        %v345 = vld.sshfl [vmem:[#allocation1] sm:$0xff pattern:$0x75316420]
        %v346 = vld.sshfl [vmem:[#allocation1 + $0x8] sm:$0xff pattern:$0x75316420]
        %v349 = vsel %vm332, %v345, 0.0
        %v350 = vsel %vm332, %v346, 0.0
        %v351 = vadd.f32 %v349, %v350
        %352 = vadd.xlane.f32.xlu0 %v351
        %v353 = vpop.xlane.xlu0 %352
        %v354 = vadd.f32 %v341, %v353
        %355 = vst.msk [vmem:[#allocation3] sm:$0xf] %vm339, %v354
        %p356 = scmp.eq.s32.totalorder %s24, 1
        // Predicated region
        $region41: #{tpu_custom_call.1} parent=31 // pred_check
          %p357 = pneg %p356
        $region42: #{tpu_custom_call.1} parent=31 // pred_check_branch
          %359 = sbr.rel (%p357) target = $region44
        $region43: #{tpu_custom_call.1} parent=31 // pred_region
          %v360 = vld [vmem:[#allocation2] sm:$0xf]
          %v361 = vmul.f32 %v360, 0.001953125
          %v362 = vld [vmem:[#allocation3] sm:$0xf]
          %v363 = vmul.f32 %v362, 0.001953125
          %v364 = vmul.f32 %v361, %v361
          %v365 = vsub.f32 %v363, %v364
          %v366 = vmax.f32 %v365, 0.0
          %v367 = vadd.f32 %v366, 1e-05
          %v368 = vrsqrt.pop %v367
          %v369 = vmul.f32 %v368, %v367
          %v370 = vmul.f32 %v369, %v368
          %v371 = vmul.f32 0.5, %v370
          %v372 = vsub.f32 1.5, %v371
          %v373 = vmul.f32 %v368, %v372
          %vm374 = vweird.f32 %v367
          %vm375 = vweird.f32 %v368
          %vm376 = vmor %vm374, %vm375
          %v377 = vsel %vm376, %v368, %v373
          %v378 = vld [vmem:[%s264] sm:$0xf]
          %v379 = vmul.f32 %v378, %v377
          %380 = vst.msk [vmem:[%s272] sm:$0xf] %vm339, %v379
          %v381 = vld [vmem:[%s268] sm:$0xf]
          %v382 = vmul.f32 %v361, %v379
          %v383 = vsub.f32 %v381, %v382
          %384 = vst.msk [vmem:[%s276] sm:$0xf] %vm339, %v383
        $region44: #{tpu_custom_call.1} parent=31 // pred_fallthru
          _
        %p385 = scmp.lt.s32.totalorder %s23, 0
        %s386 = scalar_select %p385, %s23, 0
        %s387 = smul.addr %s386, 4
        %s388 = scalar_lea.vmem %s3, %s387
        %p389 = scmp.lt.s32.totalorder %s23, 0
        %s390 = scalar_select %p389, %s23, 0
        %s391 = smul.addr %s390, 4
        %s392 = scalar_lea.vmem %s4, %s391
        // Predicated region
        $region45: #{tpu_custom_call.1} parent=31 // pred_check
          %p393 = pneg %p129
        $region46: #{tpu_custom_call.1} parent=31 // pred_check_branch
          %395 = sbr.rel (%p393) target = $region48
        $region47: #{tpu_custom_call.1} parent=31 // pred_region
          _
        $region48: #{tpu_custom_call.1} parent=31 // pred_fallthru
          _
        // Predicated region
        $region49: #{tpu_custom_call.1} parent=31 // pred_check
          %p396 = pneg %p155
        $region50: #{tpu_custom_call.1} parent=31 // pred_check_branch
          %398 = sbr.rel (%p396) target = $region52
        $region51: #{tpu_custom_call.1} parent=31 // pred_region
          _
        $region52: #{tpu_custom_call.1} parent=31 // pred_fallthru
          _
        // Predicated region
        $region53: #{tpu_custom_call.1} parent=31 // pred_check
          %p399 = pneg %p129
        $region54: #{tpu_custom_call.1} parent=31 // pred_check_branch
          %401 = sbr.rel (%p399) target = $region56
        $region55: #{tpu_custom_call.1} parent=31 // pred_region
          %p402 = scmp.lt.s32.totalorder %s23, 0
          %s403 = scalar_select %p402, %s23, 0
          %s404 = smul.addr %s403, 4
          %s405 = scalar_lea.vmem %s3, %s404
        $region56: #{tpu_custom_call.1} parent=31 // pred_fallthru
          _
        // Predicated region
        $region57: #{tpu_custom_call.1} parent=31 // pred_check
          %p406 = pneg %p155
        $region58: #{tpu_custom_call.1} parent=31 // pred_check_branch
          %408 = sbr.rel (%p406) target = $region60
        $region59: #{tpu_custom_call.1} parent=31 // pred_region
          %p409 = scmp.lt.s32.totalorder %s23, 0
          %s410 = scalar_select %p409, %s23, 0
          %s411 = smul.addr %s410, 4
          %s412 = scalar_lea.vmem %s4, %s411
        $region60: #{tpu_custom_call.1} parent=31 // pred_fallthru
          _
      $region32: #{tpu_custom_call.1} parent=5 // pred_fallthru
        _
      %p413 = scmp.le.s32.totalorder 2, %s14
      // Predicated region
      $region61: #{tpu_custom_call.1} parent=5 // pred_check
        %p414 = pneg %p413
      $region62: #{tpu_custom_call.1} parent=5 // pred_check_branch
        %416 = sbr.rel (%p414) target = $region64
      $region63: #{tpu_custom_call.1} parent=5 // pred_region
        %s417 = ssub.s32 %s14, 2
      $region64: #{tpu_custom_call.1} parent=5 // pred_fallthru
        _
    $region6: #{tpu_custom_call.1} parent=1 // loop_footer
      %s18 = sadd.s32 1, %s14
    $region7: #{tpu_custom_call.1} parent=1 // loop_footer_branch
      %13 = sbr.rel target = $region3
    $region8: #{tpu_custom_call.1} parent=1 // loop_exit
      _
    %418 = vsyncpa [#allocation5], 1
    %s419 = scalar_lea.sflag [#allocation5], 1
    %420 = vsyncpa %s419, 1

</llo_original>
